<compile_context>
chip_gen: v5e
topology: v5e:2x2
jax: 0.10.0
libtpu: 0.0.40
codegen_flags: <defaults>
</compile_context>

<pallas_src>
import numpy as np
import jax
import jax.numpy as jnp
from jax.experimental import pallas as pl
from jax.experimental.pallas import tpu as pltpu

EPS = 1e-5
LANE = 128


def _round_up(x, m):
    return (x + m - 1) // m * m


# ---------------------------------------------------------------------------
# Fused residual-block kernel (all geometry is static Python, baked at trace)
# ---------------------------------------------------------------------------
def _make_kernel(*, nphase, np_pad, lead, trail, cin_p, cout_p, compute_dtype,
                 inv_count, has_proj, conv1_src, conv2_off):
    k1 = 9 * cin_p
    k2 = 9 * cout_p

    def kernel(*refs):
        ph_refs = refs[:nphase]
        i = nphase
        w1_ref, g1_ref, b1_ref, w2_ref, g2_ref, b2_ref = refs[i:i + 6]
        i += 6
        if has_proj:
            gsk_ref, bsk_ref = refs[i:i + 2]
            i += 2
        else:
            xskip_ref = refs[i]
            i += 1
        mask_ref = refs[i]           # (1, np_pad) f32, 1.0 at valid output pixels
        out_ref = refs[i + 1]        # (cout_p, np_pad) f32, lane-dense
        kstk_ref = refs[i + 2]       # (9*max(cin_p,cout_p), np_pad) K-stacked operand scratch
        relu_ref = refs[i + 3]       # (cout_p, lead+np_pad+trail) relu1 with zero margins

        m = mask_ref[...]

        def batchnorm(y, g_ref, b_ref):
            # PyTorch training-mode BN (batch stats, biased variance, eps=1e-5) over the
            # valid pixels only; single pass (sum, sum-of-squares) in f32.
            ym = y * m
            s1 = jnp.sum(ym, axis=1, keepdims=True)
            s2 = jnp.sum(ym * ym, axis=1, keepdims=True)
            mean = s1 * inv_count
            var = s2 * inv_count - mean * mean
            scale = g_ref[...] * jax.lax.rsqrt(var + EPS)
            shift = b_ref[...] - mean * scale
            return y * scale + shift

        # ---- conv1 (+ merged 1x1 projection): pack the 9 shifted phase views once into
        # the K-stacked scratch, then a single MXU matmul with K = 9*cin_p.
        for t, (pidx, off) in enumerate(conv1_src):
            kstk_ref[t * cin_p:(t + 1) * cin_p, :] = ph_refs[pidx][:, off:off + np_pad]
        y1ext = jnp.dot(w1_ref[...], kstk_ref[:k1, :],
                        preferred_element_type=jnp.float32)

        # bn1 + relu1; invalid (extended-grid) pixels zeroed so they act as conv2's padding
        relu1 = jnp.maximum(batchnorm(y1ext[:cout_p], g1_ref, b1_ref), 0.0) * m

        # Zero only the margins (conv2 zero padding); interior is fully overwritten.
        relu_ref[:, :lead] = jnp.zeros((cout_p, lead), compute_dtype)
        relu_ref[:, lead + np_pad:] = jnp.zeros((cout_p, trail), compute_dtype)
        relu_ref[:, lead:lead + np_pad] = relu1.astype(compute_dtype)

        # ---- conv2 (3x3, stride 1, pad 1): pack the 9 shifted relu1 views, one matmul.
        for t, off in enumerate(conv2_off):
            kstk_ref[t * cout_p:(t + 1) * cout_p, :] = relu_ref[:, off:off + np_pad]
        y2 = jnp.dot(w2_ref[...], kstk_ref[:k2, :],
                     preferred_element_type=jnp.float32)
        bn2 = batchnorm(y2, g2_ref, b2_ref)

        # ---- skip path ----
        if has_proj:
            # Projection output came for free from conv1's merged matmul (rows cout_p:).
            skip = batchnorm(y1ext[cout_p:], gsk_ref, bsk_ref)
        else:
            skip = xskip_ref[...]    # exact f32 identity skip

        out_ref[...] = jnp.maximum(bn2 + skip, 0.0)

    return kernel


# ---------------------------------------------------------------------------
# Host wrapper: layout plumbing (pure rearrangement, ~1x data; no im2col)
# ---------------------------------------------------------------------------
def _residual_forward(x_nchw, params, stride, compute_dtype):
    N, Cin, H, W = x_nchw.shape
    Cout = params["w1"].shape[0]
    s = int(stride)
    has_proj = "wskip" in params

    # bf16 packs 2 rows per sublane -> pad channels to 16 for full packed tiles; f32 -> 8.
    cmult = 16 if jnp.dtype(compute_dtype).itemsize < 4 else 8
    cin_p = _round_up(Cin, cmult)
    cout_p = _round_up(Cout, cmult)

    # Geometry of the "extended" output grid (= phase-grid geometry). Valid outputs are
    # the top-left ho x wo corner of each image's hg x wg block; the rest is masked out.
    hp = _round_up(H + 2, s)                  # padded (pad=1) spatial size, stride-aligned
    wp = _round_up(W + 2, s)
    ho = (H + 2 - 3) // s + 1
    wo = (W + 2 - 3) // s + 1
    hg, wg = hp // s, wp // s
    pg = hg * wg
    npx = N * pg
    np_pad = _round_up(npx, LANE)
    lead = LANE                               # zeroed scratch margin (conv2 "top" padding)
    trail = LANE
    lx = np_pad + LANE                        # phase flat length incl. tap-offset tail room

    max_off = (2 // s) * wg + (2 // s)
    assert ho + 2 // s <= hg and wo + 2 // s <= wg
    assert ho + 1 <= hg and wo + 1 <= wg
    assert wg + 1 <= lead and max_off <= LANE

    # NHWC, channel-padded, spatially padded (pad=1 plus stride alignment)
    x = jnp.transpose(x_nchw, (0, 2, 3, 1)).astype(jnp.float32)
    xpad = jnp.pad(x, ((0, 0), (1, hp - H - 1), (1, wp - W - 1), (0, cin_p - Cin)))

    # stride**2 phase grids, channel-major, batch-flattened pixel axis on lanes
    phases_f32 = []
    for py in range(s):
        for px in range(s):
            ph = xpad[:, py::s, px::s, :]                               # (N, hg, wg, cin_p)
            ph = jnp.transpose(ph, (3, 0, 1, 2)).reshape(cin_p, npx)
            phases_f32.append(jnp.pad(ph, ((0, 0), (0, lx - npx))))
    phases = [p.astype(compute_dtype) for p in phases_f32]

    # Static tap -> (phase grid, flat offset) mapping
    taps = [(dy, dx) for dy in range(3) for dx in range(3)]
    conv1_src = tuple(((dy % s) * s + (dx % s), (dy // s) * wg + (dx // s))
                      for dy, dx in taps)
    conv2_off = tuple(lead + (dy - 1) * wg + (dx - 1) for dy, dx in taps)
    skip_phase = (1 % s) * s + (1 % s)
    skip_off = (1 // s) * wg + (1 // s)

    # Weights with taps folded along the contraction axis: (out, tap*in)
    def prep_w3x3(w, cinp, coutp):
        o, ci = w.shape[0], w.shape[1]
        wt = jnp.transpose(w, (2, 3, 1, 0)).reshape(9, ci, o)           # (tap, in, out)
        wt = jnp.pad(wt, ((0, 0), (0, cinp - ci), (0, coutp - o)))
        return jnp.transpose(wt, (2, 0, 1)).reshape(coutp, 9 * cinp)

    def prep_bn(g, b):
        g = jnp.pad(g.astype(jnp.float32), (0, cout_p - Cout)).reshape(cout_p, 1)
        b = jnp.pad(b.astype(jnp.float32), (0, cout_p - Cout)).reshape(cout_p, 1)
        return g, b

    w1flat = prep_w3x3(params["w1"].astype(jnp.float32), cin_p, cout_p)
    if has_proj:
        # Merge the 1x1 projection into conv1's matmul: stacked under w1 along the M axis,
        # populating only the center-tap (t=4) K block, whose RHS equals the skip input.
        wsk = jnp.pad(params["wskip"][:, :, 0, 0].astype(jnp.float32),
                      ((0, cout_p - Cout), (0, cin_p - Cin)))
        zblk = jnp.zeros((cout_p, 4 * cin_p), jnp.float32)
        w1flat = jnp.concatenate(
            [w1flat, jnp.concatenate([zblk, wsk, zblk], axis=1)], axis=0)
    w1flat = w1flat.astype(compute_dtype)
    w2flat = prep_w3x3(params["w2"].astype(jnp.float32),
                       cout_p, cout_p).astype(compute_dtype)

    g1, b1 = prep_bn(params["g1"], params["b1"])
    g2, b2 = prep_bn(params["g2"], params["b2"])

    inputs = list(phases) + [w1flat, g1, b1, w2flat, g2, b2]
    if has_proj:
        gsk, bsk = prep_bn(params["gskip"], params["bskip"])
        inputs += [gsk, bsk]
    else:
        # Exact f32 identity skip (not rounded through compute_dtype).
        inputs.append(phases_f32[skip_phase][:, skip_off:skip_off + np_pad])

    # Valid-pixel mask over the extended grid (static -> baked constant)
    q = np.arange(np_pad)
    r = q % pg
    valid = (q < npx) & (r // wg < ho) & (r % wg < wo)
    inputs.append(jnp.asarray(valid.astype(np.float32)).reshape(1, np_pad))

    kernel = _make_kernel(
        nphase=s * s, np_pad=np_pad, lead=lead, trail=trail,
        cin_p=cin_p, cout_p=cout_p, compute_dtype=compute_dtype,
        inv_count=1.0 / float(N * ho * wo), has_proj=has_proj,
        conv1_src=conv1_src, conv2_off=conv2_off)

    def _spec(a):
        return pl.BlockSpec(a.shape, lambda i, nd=a.ndim: (0,) * nd)

    kdim = 9 * max(cin_p, cout_p)
    out_ext = pl.pallas_call(
        kernel,
        grid=(1,),
        in_specs=[_spec(a) for a in inputs],
        out_specs=pl.BlockSpec((cout_p, np_pad), lambda i: (0, 0)),
        out_shape=jax.ShapeDtypeStruct((cout_p, np_pad), jnp.float32),
        scratch_shapes=[
            pltpu.VMEM((kdim, np_pad), compute_dtype),                 # K-stacked operands
            pltpu.VMEM((cout_p, lead + np_pad + trail), compute_dtype),  # relu1 + margins
        ],
        compiler_params=pltpu.CompilerParams(
            dimension_semantics=("arbitrary",),
            vmem_limit_bytes=32 * 1024 * 1024),
    )(*inputs)

    # Lane-dense extended output -> (N, Cout, Ho, Wo); slice/transpose is cheap XLA glue.
    out = out_ext[:Cout, :npx].reshape(Cout, N, hg, wg)[:, :, :ho, :wo]
    return jnp.transpose(out, (1, 0, 2, 3))


residual_forward = jax.jit(_residual_forward, static_argnames=("stride", "compute_dtype"))


# ---------------------------------------------------------------------------
# Deterministic parameter init (shapes per residual.__init__)
# ---------------------------------------------------------------------------
def init_params(key, Cin, Cout, stride):
    ks = jax.random.split(key, 9)
    p = {
        "w1": 0.1 * jax.random.normal(ks[0], (Cout, Cin, 3, 3), jnp.float32),
        "g1": 1.0 + 0.1 * jax.random.normal(ks[1], (Cout,), jnp.float32),
        "b1": 0.1 * jax.random.normal(ks[2], (Cout,), jnp.float32),
        "w2": 0.1 * jax.random.normal(ks[3], (Cout, Cout, 3, 3), jnp.float32),
        "g2": 1.0 + 0.1 * jax.random.normal(ks[4], (Cout,), jnp.float32),
        "b2": 0.1 * jax.random.normal(ks[5], (Cout,), jnp.float32),
    }
    if stride != 1 or Cin != Cout:
        p["wskip"] = 0.1 * jax.random.normal(ks[6], (Cout, Cin, 1, 1), jnp.float32)
        p["gskip"] = 1.0 + 0.1 * jax.random.normal(ks[7], (Cout,), jnp.float32)
        p["bskip"] = 0.1 * jax.random.normal(ks[8], (Cout,), jnp.float32)
    return p


# ---------------------------------------------------------------------------
# Pure-JAX reference (mirrors PyTorch forward, training-mode BN)
# ---------------------------------------------------------------------------
def reference(x, params, stride):
    def conv(x, w, s, pad):
        return jax.lax.conv_general_dilated(
            x, w, (s, s), ((pad, pad), (pad, pad)),
            dimension_numbers=("NCHW", "OIHW", "NCHW"))

    def bn(y, g, b):
        mean = jnp.mean(y, axis=(0, 2, 3), keepdims=True)
        var = jnp.mean(jnp.square(y - mean), axis=(0, 2, 3), keepdims=True)
        return ((y - mean) * jax.lax.rsqrt(var + EPS)
                * g.reshape(1, -1, 1, 1) + b.reshape(1, -1, 1, 1))

    y = jnp.maximum(bn(conv(x, params["w1"], stride, 1), params["g1"], params["b1"]), 0.0)
    y = bn(conv(y, params["w2"], 1, 1), params["g2"], params["b2"])
    if "wskip" in params:
        sk = bn(conv(x, params["wskip"], stride, 0), params["gskip"], params["bskip"])
    else:
        sk = x
    return jnp.maximum(y + sk, 0.0)


if __name__ == "__main__":
    key = jax.random.PRNGKey(0)
    kx_a, kp_a, kx_b, kp_b = jax.random.split(key, 4)

    configs = []
    # Config A: residual(k=3, inp_dim=4, out_dim=8, stride=2) -> projection skip
    x_a = jax.random.normal(kx_a, (2, 4, 16, 16), jnp.float32)
    configs.append((x_a, init_params(kp_a, 4, 8, 2), 2))
    # Config B: residual(k=3, inp_dim=8, out_dim=8, stride=1) -> identity skip
    x_b = jax.random.normal(kx_b, (2, 8, 16, 16), jnp.float32)
    configs.append((x_b, init_params(kp_b, 8, 8, 1), 1))

    for x, p, stride in configs:
        ref = reference(x, p, stride)

        # f32 matmul-operand path (tight tolerance)
        out_f32 = jax.block_until_ready(
            residual_forward(x, p, stride=stride, compute_dtype=jnp.float32))
        np.testing.assert_allclose(np.asarray(out_f32), np.asarray(ref),
                                   rtol=5e-4, atol=5e-4)

        # bf16 matmul-operand path (f32 MXU accumulation + f32 BN stats, f32 identity
        # skip); looser tolerance because two bf16 convs + batch-normalization amplify
        # bf16 operand rounding.
        out_bf16 = jax.block_until_ready(
            residual_forward(x, p, stride=stride, compute_dtype=jnp.bfloat16))
        np.testing.assert_allclose(np.asarray(out_bf16), np.asarray(ref),
                                   rtol=1e-1, atol=1e-1)

    print("KERNEL_OK")
</pallas_src>

<mosaic_0001>
module attributes {stable_mosaic.version = 11 : i64} {
  func.func @kernel(%arg0: i32, %arg1: memref<8x384xf32, #tpu.memory_space<vmem>>, %arg2: memref<8x384xf32, #tpu.memory_space<vmem>>, %arg3: memref<8x384xf32, #tpu.memory_space<vmem>>, %arg4: memref<8x384xf32, #tpu.memory_space<vmem>>, %arg5: memref<16x72xf32, #tpu.memory_space<vmem>>, %arg6: memref<8x1xf32, #tpu.memory_space<vmem>>, %arg7: memref<8x1xf32, #tpu.memory_space<vmem>>, %arg8: memref<8x72xf32, #tpu.memory_space<vmem>>, %arg9: memref<8x1xf32, #tpu.memory_space<vmem>>, %arg10: memref<8x1xf32, #tpu.memory_space<vmem>>, %arg11: memref<8x1xf32, #tpu.memory_space<vmem>>, %arg12: memref<8x1xf32, #tpu.memory_space<vmem>>, %arg13: memref<1x256xf32, #tpu.memory_space<vmem>>, %arg14: memref<8x256xf32, #tpu.memory_space<vmem>>, %arg15: memref<72x256xf32, #tpu.memory_space<vmem>>, %arg16: memref<8x512xf32, #tpu.memory_space<vmem>>) attributes {dimension_semantics = [#tpu.dimension_semantics<arbitrary>], iteration_bounds = array<i64: 1>, scalar_prefetch = 0 : i64, scratch_operands = 2 : i64, tpu.core_type = #tpu.core_type<tc>, window_params = [{pipeline_mode = #tpu.pipeline_mode<synchronous>, transform_indices = @transform_0, window_bounds = array<i64: 8, 384>}, {pipeline_mode = #tpu.pipeline_mode<synchronous>, transform_indices = @transform_1, window_bounds = array<i64: 8, 384>}, {pipeline_mode = #tpu.pipeline_mode<synchronous>, transform_indices = @transform_2, window_bounds = array<i64: 8, 384>}, {pipeline_mode = #tpu.pipeline_mode<synchronous>, transform_indices = @transform_3, window_bounds = array<i64: 8, 384>}, {pipeline_mode = #tpu.pipeline_mode<synchronous>, transform_indices = @transform_4, window_bounds = array<i64: 16, 72>}, {pipeline_mode = #tpu.pipeline_mode<synchronous>, transform_indices = @transform_5, window_bounds = array<i64: 8, 1>}, {pipeline_mode = #tpu.pipeline_mode<synchronous>, transform_indices = @transform_6, window_bounds = array<i64: 8, 1>}, {pipeline_mode = #tpu.pipeline_mode<synchronous>, transform_indices = @transform_7, window_bounds = array<i64: 8, 72>}, {pipeline_mode = #tpu.pipeline_mode<synchronous>, transform_indices = @transform_8, window_bounds = array<i64: 8, 1>}, {pipeline_mode = #tpu.pipeline_mode<synchronous>, transform_indices = @transform_9, window_bounds = array<i64: 8, 1>}, {pipeline_mode = #tpu.pipeline_mode<synchronous>, transform_indices = @transform_10, window_bounds = array<i64: 8, 1>}, {pipeline_mode = #tpu.pipeline_mode<synchronous>, transform_indices = @transform_11, window_bounds = array<i64: 8, 1>}, {pipeline_mode = #tpu.pipeline_mode<synchronous>, transform_indices = @transform_12, window_bounds = array<i64: 1, 256>}, {pipeline_mode = #tpu.pipeline_mode<synchronous>, transform_indices = @transform_13, window_bounds = array<i64: 8, 256>}]} {
    %c0 = arith.constant 0 : index
    %c0_0 = arith.constant 0 : index
    %0 = vector.load %arg13[%c0, %c0_0] : memref<1x256xf32, #tpu.memory_space<vmem>>, vector<1x256xf32>
    %c0_1 = arith.constant 0 : index
    %c0_2 = arith.constant 0 : index
    %1 = vector.load %arg1[%c0_1, %c0_2] : memref<8x384xf32, #tpu.memory_space<vmem>>, vector<8x256xf32>
    %c0_3 = arith.constant 0 : index
    %c0_4 = arith.constant 0 : index
    %2 = vector.load %arg15[%c0_3, %c0_4] : memref<72x256xf32, #tpu.memory_space<vmem>>, vector<8x256xf32>
    tpu.vector_store %arg15[%c0_3, %c0_4], %1 {strides = array<i32>} : memref<72x256xf32, #tpu.memory_space<vmem>>, vector<8x256xf32>,
    %c0_5 = arith.constant 0 : index
    %c0_6 = arith.constant 0 : index
    %3 = vector.load %arg2[%c0_5, %c0_6] : memref<8x384xf32, #tpu.memory_space<vmem>>, vector<8x256xf32>
    %c8 = arith.constant 8 : index
    %c0_7 = arith.constant 0 : index
    %4 = vector.load %arg15[%c8, %c0_7] : memref<72x256xf32, #tpu.memory_space<vmem>>, vector<8x256xf32>
    tpu.vector_store %arg15[%c8, %c0_7], %3 {strides = array<i32>} : memref<72x256xf32, #tpu.memory_space<vmem>>, vector<8x256xf32>,
    %c0_8 = arith.constant 0 : index
    %c1 = arith.constant 1 : index
    %5 = vector.load %arg1[%c0_8, %c1] : memref<8x384xf32, #tpu.memory_space<vmem>>, vector<8x256xf32>
    %c16 = arith.constant 16 : index
    %c0_9 = arith.constant 0 : index
    %6 = vector.load %arg15[%c16, %c0_9] : memref<72x256xf32, #tpu.memory_space<vmem>>, vector<8x256xf32>
    tpu.vector_store %arg15[%c16, %c0_9], %5 {strides = array<i32>} : memref<72x256xf32, #tpu.memory_space<vmem>>, vector<8x256xf32>,
    %c0_10 = arith.constant 0 : index
    %c0_11 = arith.constant 0 : index
    %7 = vector.load %arg3[%c0_10, %c0_11] : memref<8x384xf32, #tpu.memory_space<vmem>>, vector<8x256xf32>
    %c24 = arith.constant 24 : index
    %c0_12 = arith.constant 0 : index
    %8 = vector.load %arg15[%c24, %c0_12] : memref<72x256xf32, #tpu.memory_space<vmem>>, vector<8x256xf32>
    tpu.vector_store %arg15[%c24, %c0_12], %7 {strides = array<i32>} : memref<72x256xf32, #tpu.memory_space<vmem>>, vector<8x256xf32>,
    %c0_13 = arith.constant 0 : index
    %c0_14 = arith.constant 0 : index
    %9 = vector.load %arg4[%c0_13, %c0_14] : memref<8x384xf32, #tpu.memory_space<vmem>>, vector<8x256xf32>
    %c32 = arith.constant 32 : index
    %c0_15 = arith.constant 0 : index
    %10 = vector.load %arg15[%c32, %c0_15] : memref<72x256xf32, #tpu.memory_space<vmem>>, vector<8x256xf32>
    tpu.vector_store %arg15[%c32, %c0_15], %9 {strides = array<i32>} : memref<72x256xf32, #tpu.memory_space<vmem>>, vector<8x256xf32>,
    %c0_16 = arith.constant 0 : index
    %c1_17 = arith.constant 1 : index
    %11 = vector.load %arg3[%c0_16, %c1_17] : memref<8x384xf32, #tpu.memory_space<vmem>>, vector<8x256xf32>
    %c40 = arith.constant 40 : index
    %c0_18 = arith.constant 0 : index
    %12 = vector.load %arg15[%c40, %c0_18] : memref<72x256xf32, #tpu.memory_space<vmem>>, vector<8x256xf32>
    tpu.vector_store %arg15[%c40, %c0_18], %11 {strides = array<i32>} : memref<72x256xf32, #tpu.memory_space<vmem>>, vector<8x256xf32>,
    %c0_19 = arith.constant 0 : index
    %c9 = arith.constant 9 : index
    %13 = vector.load %arg1[%c0_19, %c9] : memref<8x384xf32, #tpu.memory_space<vmem>>, vector<8x256xf32>
    %c48 = arith.constant 48 : index
    %c0_20 = arith.constant 0 : index
    %14 = vector.load %arg15[%c48, %c0_20] : memref<72x256xf32, #tpu.memory_space<vmem>>, vector<8x256xf32>
    tpu.vector_store %arg15[%c48, %c0_20], %13 {strides = array<i32>} : memref<72x256xf32, #tpu.memory_space<vmem>>, vector<8x256xf32>,
    %c0_21 = arith.constant 0 : index
    %c9_22 = arith.constant 9 : index
    %15 = vector.load %arg2[%c0_21, %c9_22] : memref<8x384xf32, #tpu.memory_space<vmem>>, vector<8x256xf32>
    %c56 = arith.constant 56 : index
    %c0_23 = arith.constant 0 : index
    %16 = vector.load %arg15[%c56, %c0_23] : memref<72x256xf32, #tpu.memory_space<vmem>>, vector<8x256xf32>
    tpu.vector_store %arg15[%c56, %c0_23], %15 {strides = array<i32>} : memref<72x256xf32, #tpu.memory_space<vmem>>, vector<8x256xf32>,
    %c0_24 = arith.constant 0 : index
    %c10 = arith.constant 10 : index
    %17 = vector.load %arg1[%c0_24, %c10] : memref<8x384xf32, #tpu.memory_space<vmem>>, vector<8x256xf32>
    %c64 = arith.constant 64 : index
    %c0_25 = arith.constant 0 : index
    %18 = vector.load %arg15[%c64, %c0_25] : memref<72x256xf32, #tpu.memory_space<vmem>>, vector<8x256xf32>
    tpu.vector_store %arg15[%c64, %c0_25], %17 {strides = array<i32>} : memref<72x256xf32, #tpu.memory_space<vmem>>, vector<8x256xf32>,
    %c0_26 = arith.constant 0 : index
    %c0_27 = arith.constant 0 : index
    %19 = vector.load %arg5[%c0_26, %c0_27] : memref<16x72xf32, #tpu.memory_space<vmem>>, vector<16x72xf32>
    %c0_28 = arith.constant 0 : index
    %c0_29 = arith.constant 0 : index
    %20 = vector.load %arg15[%c0_28, %c0_29] : memref<72x256xf32, #tpu.memory_space<vmem>>, vector<72x256xf32>
    %cst = arith.constant dense<0.000000e+00> : vector<16x256xf32>
    %21 = tpu.matmul %19, %20, %cst {dimension_numbers = #tpu.dot_dimension_numbers<[1], [0], [0], [1], [0, 0, 1, 1], [], []>} : vector<16x72xf32>, vector<72x256xf32>, vector<16x256xf32> -> vector<16x256xf32>
    %22 = vector.extract_strided_slice %21 {offsets = [0, 0], sizes = [8, 256], strides = [1, 1]} : vector<16x256xf32> to vector<8x256xf32>
    %23 = vector.broadcast %0 : vector<1x256xf32> to vector<8x256xf32>
    %24 = arith.mulf %22, %23 : vector<8x256xf32>
    %cst_30 = arith.constant dense<0.000000e+00> : vector<8xf32>
    %25 = vector.multi_reduction <add>, %24, %cst_30 [1] : vector<8x256xf32> to vector<8xf32>
    %26 = vector.shape_cast %25 : vector<8xf32> to vector<8x1xf32>
    %27 = arith.mulf %24, %24 : vector<8x256xf32>
    %cst_31 = arith.constant dense<0.000000e+00> : vector<8xf32>
    %28 = vector.multi_reduction <add>, %27, %cst_31 [1] : vector<8x256xf32> to vector<8xf32>
    %29 = vector.shape_cast %28 : vector<8xf32> to vector<8x1xf32>
    %cst_32 = arith.constant 7.812500e-03 : f32
    %30 = vector.broadcast %cst_32 : f32 to vector<8x1xf32>
    %31 = arith.mulf %26, %30 : vector<8x1xf32>
    %cst_33 = arith.constant 7.812500e-03 : f32
    %32 = vector.broadcast %cst_33 : f32 to vector<8x1xf32>
    %33 = arith.mulf %29, %32 : vector<8x1xf32>
    %34 = arith.mulf %31, %31 : vector<8x1xf32>
    %35 = arith.subf %33, %34 : vector<8x1xf32>
    %c0_34 = arith.constant 0 : index
    %c0_35 = arith.constant 0 : index
    %36 = vector.load %arg6[%c0_34, %c0_35] : memref<8x1xf32, #tpu.memory_space<vmem>>, vector<8x1xf32>
    %cst_36 = arith.constant 9.99999974E-6 : f32
    %37 = vector.broadcast %cst_36 : f32 to vector<8x1xf32>
    %38 = arith.addf %35, %37 : vector<8x1xf32>
    %39 = math.rsqrt %38 : vector<8x1xf32>
    %40 = arith.mulf %36, %39 : vector<8x1xf32>
    %c0_37 = arith.constant 0 : index
    %c0_38 = arith.constant 0 : index
    %41 = vector.load %arg7[%c0_37, %c0_38] : memref<8x1xf32, #tpu.memory_space<vmem>>, vector<8x1xf32>
    %42 = arith.mulf %31, %40 : vector<8x1xf32>
    %43 = arith.subf %41, %42 : vector<8x1xf32>
    %44 = vector.broadcast %40 : vector<8x1xf32> to vector<8x256xf32>
    %45 = arith.mulf %22, %44 : vector<8x256xf32>
    %46 = vector.broadcast %43 : vector<8x1xf32> to vector<8x256xf32>
    %47 = arith.addf %45, %46 : vector<8x256xf32>
    %cst_39 = arith.constant 0.000000e+00 : f32
    %48 = vector.broadcast %cst_39 : f32 to vector<8x256xf32>
    %49 = arith.maximumf %47, %48 : vector<8x256xf32>
    %50 = vector.broadcast %0 : vector<1x256xf32> to vector<8x256xf32>
    %51 = arith.mulf %49, %50 : vector<8x256xf32>
    %cst_40 = arith.constant 0.000000e+00 : f32
    %52 = vector.broadcast %cst_40 : f32 to vector<8x128xf32>
    %c0_41 = arith.constant 0 : index
    %c0_42 = arith.constant 0 : index
    %53 = vector.load %arg16[%c0_41, %c0_42] : memref<8x512xf32, #tpu.memory_space<vmem>>, vector<8x128xf32>
    tpu.vector_store %arg16[%c0_41, %c0_42], %52 {strides = array<i32>} : memref<8x512xf32, #tpu.memory_space<vmem>>, vector<8x128xf32>,
    %cst_43 = arith.constant 0.000000e+00 : f32
    %54 = vector.broadcast %cst_43 : f32 to vector<8x128xf32>
    %c0_44 = arith.constant 0 : index
    %c384 = arith.constant 384 : index
    %55 = vector.load %arg16[%c0_44, %c384] : memref<8x512xf32, #tpu.memory_space<vmem>>, vector<8x128xf32>
    tpu.vector_store %arg16[%c0_44, %c384], %54 {strides = array<i32>} : memref<8x512xf32, #tpu.memory_space<vmem>>, vector<8x128xf32>,
    %c0_45 = arith.constant 0 : index
    %c128 = arith.constant 128 : index
    %56 = vector.load %arg16[%c0_45, %c128] : memref<8x512xf32, #tpu.memory_space<vmem>>, vector<8x256xf32>
    tpu.vector_store %arg16[%c0_45, %c128], %51 {strides = array<i32>} : memref<8x512xf32, #tpu.memory_space<vmem>>, vector<8x256xf32>,
    %c0_46 = arith.constant 0 : index
    %c118 = arith.constant 118 : index
    %57 = vector.load %arg16[%c0_46, %c118] : memref<8x512xf32, #tpu.memory_space<vmem>>, vector<8x256xf32>
    %c0_47 = arith.constant 0 : index
    %c0_48 = arith.constant 0 : index
    %58 = vector.load %arg15[%c0_47, %c0_48] : memref<72x256xf32, #tpu.memory_space<vmem>>, vector<8x256xf32>
    tpu.vector_store %arg15[%c0_47, %c0_48], %57 {strides = array<i32>} : memref<72x256xf32, #tpu.memory_space<vmem>>, vector<8x256xf32>,
    %c0_49 = arith.constant 0 : index
    %c119 = arith.constant 119 : index
    %59 = vector.load %arg16[%c0_49, %c119] : memref<8x512xf32, #tpu.memory_space<vmem>>, vector<8x256xf32>
    %c8_50 = arith.constant 8 : index
    %c0_51 = arith.constant 0 : index
    %60 = vector.load %arg15[%c8_50, %c0_51] : memref<72x256xf32, #tpu.memory_space<vmem>>, vector<8x256xf32>
    tpu.vector_store %arg15[%c8_50, %c0_51], %59 {strides = array<i32>} : memref<72x256xf32, #tpu.memory_space<vmem>>, vector<8x256xf32>,
    %c0_52 = arith.constant 0 : index
    %c120 = arith.constant 120 : index
    %61 = vector.load %arg16[%c0_52, %c120] : memref<8x512xf32, #tpu.memory_space<vmem>>, vector<8x256xf32>
    %c16_53 = arith.constant 16 : index
    %c0_54 = arith.constant 0 : index
    %62 = vector.load %arg15[%c16_53, %c0_54] : memref<72x256xf32, #tpu.memory_space<vmem>>, vector<8x256xf32>
    tpu.vector_store %arg15[%c16_53, %c0_54], %61 {strides = array<i32>} : memref<72x256xf32, #tpu.memory_space<vmem>>, vector<8x256xf32>,
    %c0_55 = arith.constant 0 : index
    %c127 = arith.constant 127 : index
    %63 = vector.load %arg16[%c0_55, %c127] : memref<8x512xf32, #tpu.memory_space<vmem>>, vector<8x256xf32>
    %c24_56 = arith.constant 24 : index
    %c0_57 = arith.constant 0 : index
    %64 = vector.load %arg15[%c24_56, %c0_57] : memref<72x256xf32, #tpu.memory_space<vmem>>, vector<8x256xf32>
    tpu.vector_store %arg15[%c24_56, %c0_57], %63 {strides = array<i32>} : memref<72x256xf32, #tpu.memory_space<vmem>>, vector<8x256xf32>,
    %c0_58 = arith.constant 0 : index
    %c128_59 = arith.constant 128 : index
    %65 = vector.load %arg16[%c0_58, %c128_59] : memref<8x512xf32, #tpu.memory_space<vmem>>, vector<8x256xf32>
    %c32_60 = arith.constant 32 : index
    %c0_61 = arith.constant 0 : index
    %66 = vector.load %arg15[%c32_60, %c0_61] : memref<72x256xf32, #tpu.memory_space<vmem>>, vector<8x256xf32>
    tpu.vector_store %arg15[%c32_60, %c0_61], %65 {strides = array<i32>} : memref<72x256xf32, #tpu.memory_space<vmem>>, vector<8x256xf32>,
    %c0_62 = arith.constant 0 : index
    %c129 = arith.constant 129 : index
    %67 = vector.load %arg16[%c0_62, %c129] : memref<8x512xf32, #tpu.memory_space<vmem>>, vector<8x256xf32>
    %c40_63 = arith.constant 40 : index
    %c0_64 = arith.constant 0 : index
    %68 = vector.load %arg15[%c40_63, %c0_64] : memref<72x256xf32, #tpu.memory_space<vmem>>, vector<8x256xf32>
    tpu.vector_store %arg15[%c40_63, %c0_64], %67 {strides = array<i32>} : memref<72x256xf32, #tpu.memory_space<vmem>>, vector<8x256xf32>,
    %c0_65 = arith.constant 0 : index
    %c136 = arith.constant 136 : index
    %69 = vector.load %arg16[%c0_65, %c136] : memref<8x512xf32, #tpu.memory_space<vmem>>, vector<8x256xf32>
    %c48_66 = arith.constant 48 : index
    %c0_67 = arith.constant 0 : index
    %70 = vector.load %arg15[%c48_66, %c0_67] : memref<72x256xf32, #tpu.memory_space<vmem>>, vector<8x256xf32>
    tpu.vector_store %arg15[%c48_66, %c0_67], %69 {strides = array<i32>} : memref<72x256xf32, #tpu.memory_space<vmem>>, vector<8x256xf32>,
    %c0_68 = arith.constant 0 : index
    %c137 = arith.constant 137 : index
    %71 = vector.load %arg16[%c0_68, %c137] : memref<8x512xf32, #tpu.memory_space<vmem>>, vector<8x256xf32>
    %c56_69 = arith.constant 56 : index
    %c0_70 = arith.constant 0 : index
    %72 = vector.load %arg15[%c56_69, %c0_70] : memref<72x256xf32, #tpu.memory_space<vmem>>, vector<8x256xf32>
    tpu.vector_store %arg15[%c56_69, %c0_70], %71 {strides = array<i32>} : memref<72x256xf32, #tpu.memory_space<vmem>>, vector<8x256xf32>,
    %c0_71 = arith.constant 0 : index
    %c138 = arith.constant 138 : index
    %73 = vector.load %arg16[%c0_71, %c138] : memref<8x512xf32, #tpu.memory_space<vmem>>, vector<8x256xf32>
    %c64_72 = arith.constant 64 : index
    %c0_73 = arith.constant 0 : index
    %74 = vector.load %arg15[%c64_72, %c0_73] : memref<72x256xf32, #tpu.memory_space<vmem>>, vector<8x256xf32>
    tpu.vector_store %arg15[%c64_72, %c0_73], %73 {strides = array<i32>} : memref<72x256xf32, #tpu.memory_space<vmem>>, vector<8x256xf32>,
    %c0_74 = arith.constant 0 : index
    %c0_75 = arith.constant 0 : index
    %75 = vector.load %arg8[%c0_74, %c0_75] : memref<8x72xf32, #tpu.memory_space<vmem>>, vector<8x72xf32>
    %c0_76 = arith.constant 0 : index
    %c0_77 = arith.constant 0 : index
    %76 = vector.load %arg15[%c0_76, %c0_77] : memref<72x256xf32, #tpu.memory_space<vmem>>, vector<72x256xf32>
    %cst_78 = arith.constant dense<0.000000e+00> : vector<8x256xf32>
    %77 = tpu.matmul %75, %76, %cst_78 {dimension_numbers = #tpu.dot_dimension_numbers<[1], [0], [0], [1], [0, 0, 1, 1], [], []>} : vector<8x72xf32>, vector<72x256xf32>, vector<8x256xf32> -> vector<8x256xf32>
    %78 = vector.broadcast %0 : vector<1x256xf32> to vector<8x256xf32>
    %79 = arith.mulf %77, %78 : vector<8x256xf32>
    %cst_79 = arith.constant dense<0.000000e+00> : vector<8xf32>
    %80 = vector.multi_reduction <add>, %79, %cst_79 [1] : vector<8x256xf32> to vector<8xf32>
    %81 = vector.shape_cast %80 : vector<8xf32> to vector<8x1xf32>
    %82 = arith.mulf %79, %79 : vector<8x256xf32>
    %cst_80 = arith.constant dense<0.000000e+00> : vector<8xf32>
    %83 = vector.multi_reduction <add>, %82, %cst_80 [1] : vector<8x256xf32> to vector<8xf32>
    %84 = vector.shape_cast %83 : vector<8xf32> to vector<8x1xf32>
    %cst_81 = arith.constant 7.812500e-03 : f32
    %85 = vector.broadcast %cst_81 : f32 to vector<8x1xf32>
    %86 = arith.mulf %81, %85 : vector<8x1xf32>
    %cst_82 = arith.constant 7.812500e-03 : f32
    %87 = vector.broadcast %cst_82 : f32 to vector<8x1xf32>
    %88 = arith.mulf %84, %87 : vector<8x1xf32>
    %89 = arith.mulf %86, %86 : vector<8x1xf32>
    %90 = arith.subf %88, %89 : vector<8x1xf32>
    %c0_83 = arith.constant 0 : index
    %c0_84 = arith.constant 0 : index
    %91 = vector.load %arg9[%c0_83, %c0_84] : memref<8x1xf32, #tpu.memory_space<vmem>>, vector<8x1xf32>
    %cst_85 = arith.constant 9.99999974E-6 : f32
    %92 = vector.broadcast %cst_85 : f32 to vector<8x1xf32>
    %93 = arith.addf %90, %92 : vector<8x1xf32>
    %94 = math.rsqrt %93 : vector<8x1xf32>
    %95 = arith.mulf %91, %94 : vector<8x1xf32>
    %c0_86 = arith.constant 0 : index
    %c0_87 = arith.constant 0 : index
    %96 = vector.load %arg10[%c0_86, %c0_87] : memref<8x1xf32, #tpu.memory_space<vmem>>, vector<8x1xf32>
    %97 = arith.mulf %86, %95 : vector<8x1xf32>
    %98 = arith.subf %96, %97 : vector<8x1xf32>
    %99 = vector.broadcast %95 : vector<8x1xf32> to vector<8x256xf32>
    %100 = arith.mulf %77, %99 : vector<8x256xf32>
    %101 = vector.broadcast %98 : vector<8x1xf32> to vector<8x256xf32>
    %102 = arith.addf %100, %101 : vector<8x256xf32>
    %103 = vector.extract_strided_slice %21 {offsets = [8, 0], sizes = [8, 256], strides = [1, 1]} : vector<16x256xf32> to vector<8x256xf32>
    %104 = vector.broadcast %0 : vector<1x256xf32> to vector<8x256xf32>
    %105 = arith.mulf %103, %104 : vector<8x256xf32>
    %cst_88 = arith.constant dense<0.000000e+00> : vector<8xf32>
    %106 = vector.multi_reduction <add>, %105, %cst_88 [1] : vector<8x256xf32> to vector<8xf32>
    %107 = vector.shape_cast %106 : vector<8xf32> to vector<8x1xf32>
    %108 = arith.mulf %105, %105 : vector<8x256xf32>
    %cst_89 = arith.constant dense<0.000000e+00> : vector<8xf32>
    %109 = vector.multi_reduction <add>, %108, %cst_89 [1] : vector<8x256xf32> to vector<8xf32>
    %110 = vector.shape_cast %109 : vector<8xf32> to vector<8x1xf32>
    %cst_90 = arith.constant 7.812500e-03 : f32
    %111 = vector.broadcast %cst_90 : f32 to vector<8x1xf32>
    %112 = arith.mulf %107, %111 : vector<8x1xf32>
    %cst_91 = arith.constant 7.812500e-03 : f32
    %113 = vector.broadcast %cst_91 : f32 to vector<8x1xf32>
    %114 = arith.mulf %110, %113 : vector<8x1xf32>
    %115 = arith.mulf %112, %112 : vector<8x1xf32>
    %116 = arith.subf %114, %115 : vector<8x1xf32>
    %c0_92 = arith.constant 0 : index
    %c0_93 = arith.constant 0 : index
    %117 = vector.load %arg11[%c0_92, %c0_93] : memref<8x1xf32, #tpu.memory_space<vmem>>, vector<8x1xf32>
    %cst_94 = arith.constant 9.99999974E-6 : f32
    %118 = vector.broadcast %cst_94 : f32 to vector<8x1xf32>
    %119 = arith.addf %116, %118 : vector<8x1xf32>
    %120 = math.rsqrt %119 : vector<8x1xf32>
    %121 = arith.mulf %117, %120 : vector<8x1xf32>
    %c0_95 = arith.constant 0 : index
    %c0_96 = arith.constant 0 : index
    %122 = vector.load %arg12[%c0_95, %c0_96] : memref<8x1xf32, #tpu.memory_space<vmem>>, vector<8x1xf32>
    %123 = arith.mulf %112, %121 : vector<8x1xf32>
    %124 = arith.subf %122, %123 : vector<8x1xf32>
    %125 = vector.broadcast %121 : vector<8x1xf32> to vector<8x256xf32>
    %126 = arith.mulf %103, %125 : vector<8x256xf32>
    %127 = vector.broadcast %124 : vector<8x1xf32> to vector<8x256xf32>
    %128 = arith.addf %126, %127 : vector<8x256xf32>
    %129 = arith.addf %102, %128 : vector<8x256xf32>
    %cst_97 = arith.constant 0.000000e+00 : f32
    %130 = vector.broadcast %cst_97 : f32 to vector<8x256xf32>
    %131 = arith.maximumf %129, %130 : vector<8x256xf32>
    %c0_98 = arith.constant 0 : index
    %c0_99 = arith.constant 0 : index
    %132 = vector.load %arg14[%c0_98, %c0_99] : memref<8x256xf32, #tpu.memory_space<vmem>>, vector<8x256xf32>
    tpu.vector_store %arg14[%c0_98, %c0_99], %131 {strides = array<i32>} : memref<8x256xf32, #tpu.memory_space<vmem>>, vector<8x256xf32>,
    return
  }
  func.func @transform_0(%arg0: i32) -> (i32, i32) {
    %c0_i32 = arith.constant 0 : i32
    %c0_i32_0 = arith.constant 0 : i32
    %c0_i32_1 = arith.constant 0 : i32
    return %c0_i32, %c0_i32_0 : i32, i32
  }
  func.func @transform_1(%arg0: i32) -> (i32, i32) {
    %c0_i32 = arith.constant 0 : i32
    %c0_i32_0 = arith.constant 0 : i32
    %c0_i32_1 = arith.constant 0 : i32
    return %c0_i32, %c0_i32_0 : i32, i32
  }
  func.func @transform_2(%arg0: i32) -> (i32, i32) {
    %c0_i32 = arith.constant 0 : i32
    %c0_i32_0 = arith.constant 0 : i32
    %c0_i32_1 = arith.constant 0 : i32
    return %c0_i32, %c0_i32_0 : i32, i32
  }
  func.func @transform_3(%arg0: i32) -> (i32, i32) {
    %c0_i32 = arith.constant 0 : i32
    %c0_i32_0 = arith.constant 0 : i32
    %c0_i32_1 = arith.constant 0 : i32
    return %c0_i32, %c0_i32_0 : i32, i32
  }
  func.func @transform_4(%arg0: i32) -> (i32, i32) {
    %c0_i32 = arith.constant 0 : i32
    %c0_i32_0 = arith.constant 0 : i32
    %c0_i32_1 = arith.constant 0 : i32
    return %c0_i32, %c0_i32_0 : i32, i32
  }
  func.func @transform_5(%arg0: i32) -> (i32, i32) {
    %c0_i32 = arith.constant 0 : i32
    %c0_i32_0 = arith.constant 0 : i32
    %c0_i32_1 = arith.constant 0 : i32
    return %c0_i32, %c0_i32_0 : i32, i32
  }
  func.func @transform_6(%arg0: i32) -> (i32, i32) {
    %c0_i32 = arith.constant 0 : i32
    %c0_i32_0 = arith.constant 0 : i32
    %c0_i32_1 = arith.constant 0 : i32
    return %c0_i32, %c0_i32_0 : i32, i32
  }
  func.func @transform_7(%arg0: i32) -> (i32, i32) {
    %c0_i32 = arith.constant 0 : i32
    %c0_i32_0 = arith.constant 0 : i32
    %c0_i32_1 = arith.constant 0 : i32
    return %c0_i32, %c0_i32_0 : i32, i32
  }
  func.func @transform_8(%arg0: i32) -> (i32, i32) {
    %c0_i32 = arith.constant 0 : i32
    %c0_i32_0 = arith.constant 0 : i32
    %c0_i32_1 = arith.constant 0 : i32
    return %c0_i32, %c0_i32_0 : i32, i32
  }
  func.func @transform_9(%arg0: i32) -> (i32, i32) {
    %c0_i32 = arith.constant 0 : i32
    %c0_i32_0 = arith.constant 0 : i32
    %c0_i32_1 = arith.constant 0 : i32
    return %c0_i32, %c0_i32_0 : i32, i32
  }
  func.func @transform_10(%arg0: i32) -> (i32, i32) {
    %c0_i32 = arith.constant 0 : i32
    %c0_i32_0 = arith.constant 0 : i32
    %c0_i32_1 = arith.constant 0 : i32
    return %c0_i32, %c0_i32_0 : i32, i32
  }
  func.func @transform_11(%arg0: i32) -> (i32, i32) {
    %c0_i32 = arith.constant 0 : i32
    %c0_i32_0 = arith.constant 0 : i32
    %c0_i32_1 = arith.constant 0 : i32
    return %c0_i32, %c0_i32_0 : i32, i32
  }
  func.func @transform_12(%arg0: i32) -> (i32, i32) {
    %c0_i32 = arith.constant 0 : i32
    %c0_i32_0 = arith.constant 0 : i32
    %c0_i32_1 = arith.constant 0 : i32
    return %c0_i32, %c0_i32_0 : i32, i32
  }
  func.func @transform_13(%arg0: i32) -> (i32, i32) {
    %c0_i32 = arith.constant 0 : i32
    %c0_i32_0 = arith.constant 0 : i32
    %c0_i32_1 = arith.constant 0 : i32
    return %c0_i32, %c0_i32_0 : i32, i32
  }
}

</mosaic_0001>

<llo_original>
// kernel: _residual_forward.1
$region0: #{_residual_forward.1}
  #allocation0 [shape = 'u32[]', space=smem, size = 0x4, offset = 0x4, fixed_abs, tag = 'smem constant byte address 0x4 - core index']
  #allocation1 [shape = 'u32[72,128]{1,0:T(1,128)}', space=vmem, size = 0x9000, scoped, tag = 'internal scratch']
  #allocation2 [shape = 'f32[72,256]{1,0:T(8,128)}', space=vmem, size = 0x12000, scoped, tag = 'scratch operand']
  #allocation3 [shape = 'f32[8,512]{1,0:T(8,128)}', space=vmem, size = 0x4000, scoped, tag = 'scratch operand']
  %s0 = inlined_call_operand.vmem [shape: f32[8,384], index: 0, kind: input, shape index: {}]
  %s1 = inlined_call_operand.vmem [shape: f32[8,384], index: 1, kind: input, shape index: {}]
  %s2 = inlined_call_operand.vmem [shape: f32[8,384], index: 2, kind: input, shape index: {}]
  %s3 = inlined_call_operand.vmem [shape: f32[8,384], index: 3, kind: input, shape index: {}]
  %s4 = inlined_call_operand.vmem [shape: f32[16,72], index: 4, kind: input, shape index: {}]
  %s5 = inlined_call_operand.vmem [shape: f32[8,1], index: 5, kind: input, shape index: {}]
  %s6 = inlined_call_operand.vmem [shape: f32[8,1], index: 6, kind: input, shape index: {}]
  %s7 = inlined_call_operand.vmem [shape: f32[8,72], index: 7, kind: input, shape index: {}]
  %s8 = inlined_call_operand.vmem [shape: f32[8,1], index: 8, kind: input, shape index: {}]
  %s9 = inlined_call_operand.vmem [shape: f32[8,1], index: 9, kind: input, shape index: {}]
  %s10 = inlined_call_operand.vmem [shape: f32[8,1], index: 10, kind: input, shape index: {}]
  %s11 = inlined_call_operand.vmem [shape: f32[8,1], index: 11, kind: input, shape index: {}]
  %s12 = inlined_call_operand.vmem [shape: f32[1,256], index: 12, kind: input, shape index: {}]
  %s13 = inlined_call_operand.vmem [shape: f32[8,256], index: 13, kind: output, shape index: {}]
  %s14 = sld [smem:[#allocation0]]
  $region62: #{_residual_forward.1} parent=0
    _
  %s16 = ssub.s32 1, %s14
  %s17 = scalar_select 0, %s16, %s14
  // Predicated region
  $region2: #{_residual_forward.1} parent=0 // pred_check
    _
  $region3: #{_residual_forward.1} parent=0 // pred_check_branch
    %19 = sbr.rel (0) target = $region5
  $region4: #{_residual_forward.1} parent=0 // pred_region
    _
  $region5: #{_residual_forward.1} parent=0 // pred_fallthru
    _
  // Predicated region
  $region6: #{_residual_forward.1} parent=0 // pred_check
    _
  $region7: #{_residual_forward.1} parent=0 // pred_check_branch
    %21 = sbr.rel (0) target = $region9
  $region8: #{_residual_forward.1} parent=0 // pred_region
    _
  $region9: #{_residual_forward.1} parent=0 // pred_fallthru
    _
  // Predicated region
  $region10: #{_residual_forward.1} parent=0 // pred_check
    _
  $region11: #{_residual_forward.1} parent=0 // pred_check_branch
    %23 = sbr.rel (0) target = $region13
  $region12: #{_residual_forward.1} parent=0 // pred_region
    _
  $region13: #{_residual_forward.1} parent=0 // pred_fallthru
    _
  // Predicated region
  $region14: #{_residual_forward.1} parent=0 // pred_check
    _
  $region15: #{_residual_forward.1} parent=0 // pred_check_branch
    %25 = sbr.rel (0) target = $region17
  $region16: #{_residual_forward.1} parent=0 // pred_region
    _
  $region17: #{_residual_forward.1} parent=0 // pred_fallthru
    _
  // Predicated region
  $region18: #{_residual_forward.1} parent=0 // pred_check
    _
  $region19: #{_residual_forward.1} parent=0 // pred_check_branch
    %27 = sbr.rel (0) target = $region21
  $region20: #{_residual_forward.1} parent=0 // pred_region
    _
  $region21: #{_residual_forward.1} parent=0 // pred_fallthru
    _
  // Predicated region
  $region22: #{_residual_forward.1} parent=0 // pred_check
    _
  $region23: #{_residual_forward.1} parent=0 // pred_check_branch
    %29 = sbr.rel (0) target = $region25
  $region24: #{_residual_forward.1} parent=0 // pred_region
    _
  $region25: #{_residual_forward.1} parent=0 // pred_fallthru
    _
  // Predicated region
  $region26: #{_residual_forward.1} parent=0 // pred_check
    _
  $region27: #{_residual_forward.1} parent=0 // pred_check_branch
    %31 = sbr.rel (0) target = $region29
  $region28: #{_residual_forward.1} parent=0 // pred_region
    _
  $region29: #{_residual_forward.1} parent=0 // pred_fallthru
    _
  // Predicated region
  $region30: #{_residual_forward.1} parent=0 // pred_check
    _
  $region31: #{_residual_forward.1} parent=0 // pred_check_branch
    %33 = sbr.rel (0) target = $region33
  $region32: #{_residual_forward.1} parent=0 // pred_region
    _
  $region33: #{_residual_forward.1} parent=0 // pred_fallthru
    _
  // Predicated region
  $region34: #{_residual_forward.1} parent=0 // pred_check
    _
  $region35: #{_residual_forward.1} parent=0 // pred_check_branch
    %35 = sbr.rel (0) target = $region37
  $region36: #{_residual_forward.1} parent=0 // pred_region
    _
  $region37: #{_residual_forward.1} parent=0 // pred_fallthru
    _
  // Predicated region
  $region38: #{_residual_forward.1} parent=0 // pred_check
    _
  $region39: #{_residual_forward.1} parent=0 // pred_check_branch
    %37 = sbr.rel (0) target = $region41
  $region40: #{_residual_forward.1} parent=0 // pred_region
    _
  $region41: #{_residual_forward.1} parent=0 // pred_fallthru
    _
  // Predicated region
  $region42: #{_residual_forward.1} parent=0 // pred_check
    _
  $region43: #{_residual_forward.1} parent=0 // pred_check_branch
    %39 = sbr.rel (0) target = $region45
  $region44: #{_residual_forward.1} parent=0 // pred_region
    _
  $region45: #{_residual_forward.1} parent=0 // pred_fallthru
    _
  // Predicated region
  $region46: #{_residual_forward.1} parent=0 // pred_check
    _
  $region47: #{_residual_forward.1} parent=0 // pred_check_branch
    %41 = sbr.rel (0) target = $region49
  $region48: #{_residual_forward.1} parent=0 // pred_region
    _
  $region49: #{_residual_forward.1} parent=0 // pred_fallthru
    _
  // Predicated region
  $region50: #{_residual_forward.1} parent=0 // pred_check
    _
  $region51: #{_residual_forward.1} parent=0 // pred_check_branch
    %43 = sbr.rel (0) target = $region53
  $region52: #{_residual_forward.1} parent=0 // pred_region
    _
  $region53: #{_residual_forward.1} parent=0 // pred_fallthru
    _
  %v44 = vld [vmem:[%s12] sm:$0x3]
  %v45 = vld [vmem:[%s0] sm:$0xff]
  %v46 = vld [vmem:[%s0 + $0x8] sm:$0xff]
  %47 = vst [vmem:[#allocation2] sm:$0xff] %v45
  %48 = vst [vmem:[#allocation2 + $0x8] sm:$0xff] %v46
  %v49 = vld [vmem:[%s1] sm:$0xff]
  %v50 = vld [vmem:[%s1 + $0x8] sm:$0xff]
  %51 = vst [vmem:[#allocation2 + $0x10] sm:$0xff] %v49
  %52 = vst [vmem:[#allocation2 + $0x18] sm:$0xff] %v50
  %v53 = vld [vmem:[%s0] sm:$0xff]
  %v54 = vld [vmem:[%s0 + $0x8] sm:$0xff]
  %v55 = vld [vmem:[%s0 + $0x10] sm:$0xff]
  %59 = vrot.lane.b32.xlu0 %v53, 127
  %v60 = vpop.permute.xlu0 %59
  %61 = vrot.lane.b32.xlu0 %v54, 127
  %v62 = vpop.permute.xlu0 %61
  %63 = vrot.lane.b32.xlu0 %v55, 127
  %v64 = vpop.permute.xlu0 %63
  %vm65 = vcmask 1039360
  %v66 = vsel %vm65, %v60, %v62
  %v67 = vsel %vm65, %v62, %v64
  %70 = vst [vmem:[#allocation2 + $0x20] sm:$0xff] %v66
  %71 = vst [vmem:[#allocation2 + $0x28] sm:$0xff] %v67
  %v72 = vld [vmem:[%s2] sm:$0xff]
  %v73 = vld [vmem:[%s2 + $0x8] sm:$0xff]
  %74 = vst [vmem:[#allocation2 + $0x30] sm:$0xff] %v72
  %75 = vst [vmem:[#allocation2 + $0x38] sm:$0xff] %v73
  %v76 = vld [vmem:[%s3] sm:$0xff]
  %v77 = vld [vmem:[%s3 + $0x8] sm:$0xff]
  %78 = vst [vmem:[#allocation2 + $0x40] sm:$0xff] %v76
  %79 = vst [vmem:[#allocation2 + $0x48] sm:$0xff] %v77
  %v80 = vld [vmem:[%s2] sm:$0xff]
  %v81 = vld [vmem:[%s2 + $0x8] sm:$0xff]
  %v82 = vld [vmem:[%s2 + $0x10] sm:$0xff]
  %86 = vrot.lane.b32.xlu0 %v80, 127
  %v87 = vpop.permute.xlu0 %86
  %88 = vrot.lane.b32.xlu0 %v81, 127
  %v89 = vpop.permute.xlu0 %88
  %90 = vrot.lane.b32.xlu0 %v82, 127
  %v91 = vpop.permute.xlu0 %90
  %v92 = vsel %vm65, %v87, %v89
  %v93 = vsel %vm65, %v89, %v91
  %96 = vst [vmem:[#allocation2 + $0x50] sm:$0xff] %v92
  %97 = vst [vmem:[#allocation2 + $0x58] sm:$0xff] %v93
  %v98 = vld [vmem:[%s0] sm:$0xff]
  %v99 = vld [vmem:[%s0 + $0x8] sm:$0xff]
  %v100 = vld [vmem:[%s0 + $0x10] sm:$0xff]
  %104 = vrot.lane.b32.xlu0 %v98, 119
  %v105 = vpop.permute.xlu0 %104
  %106 = vrot.lane.b32.xlu0 %v99, 119
  %v107 = vpop.permute.xlu0 %106
  %108 = vrot.lane.b32.xlu0 %v100, 119
  %v109 = vpop.permute.xlu0 %108
  %vm110 = vcmask 973824
  %v111 = vsel %vm110, %v105, %v107
  %v112 = vsel %vm110, %v107, %v109
  %115 = vst [vmem:[#allocation2 + $0x60] sm:$0xff] %v111
  %116 = vst [vmem:[#allocation2 + $0x68] sm:$0xff] %v112
  %v117 = vld [vmem:[%s1] sm:$0xff]
  %v118 = vld [vmem:[%s1 + $0x8] sm:$0xff]
  %v119 = vld [vmem:[%s1 + $0x10] sm:$0xff]
  %123 = vrot.lane.b32.xlu0 %v117, 119
  %v124 = vpop.permute.xlu0 %123
  %125 = vrot.lane.b32.xlu0 %v118, 119
  %v126 = vpop.permute.xlu0 %125
  %127 = vrot.lane.b32.xlu0 %v119, 119
  %v128 = vpop.permute.xlu0 %127
  %v129 = vsel %vm110, %v124, %v126
  %v130 = vsel %vm110, %v126, %v128
  %133 = vst [vmem:[#allocation2 + $0x70] sm:$0xff] %v129
  %134 = vst [vmem:[#allocation2 + $0x78] sm:$0xff] %v130
  %v135 = vld [vmem:[%s0] sm:$0xff]
  %v136 = vld [vmem:[%s0 + $0x8] sm:$0xff]
  %v137 = vld [vmem:[%s0 + $0x10] sm:$0xff]
  %141 = vrot.lane.b32.xlu0 %v135, 118
  %v142 = vpop.permute.xlu0 %141
  %143 = vrot.lane.b32.xlu0 %v136, 118
  %v144 = vpop.permute.xlu0 %143
  %145 = vrot.lane.b32.xlu0 %v137, 118
  %v146 = vpop.permute.xlu0 %145
  %vm147 = vcmask 965632
  %v148 = vsel %vm147, %v142, %v144
  %v149 = vsel %vm147, %v144, %v146
  %152 = vst [vmem:[#allocation2 + $0x80] sm:$0xff] %v148
  %153 = vst [vmem:[#allocation2 + $0x88] sm:$0xff] %v149
  %v154 = vld [vmem:[%s4] sm:$0xff]
  %v155 = vld [vmem:[%s4 + $0x8] sm:$0xff]
  %v156 = vld [vmem:[#allocation2] sm:$0xff]
  %v157 = vld [vmem:[#allocation2 + $0x8] sm:$0xff]
  %v158 = vld [vmem:[#allocation2 + $0x10] sm:$0xff]
  %v159 = vld [vmem:[#allocation2 + $0x18] sm:$0xff]
  %v160 = vld [vmem:[#allocation2 + $0x20] sm:$0xff]
  %v161 = vld [vmem:[#allocation2 + $0x28] sm:$0xff]
  %v162 = vld [vmem:[#allocation2 + $0x30] sm:$0xff]
  %v163 = vld [vmem:[#allocation2 + $0x38] sm:$0xff]
  %v164 = vld [vmem:[#allocation2 + $0x40] sm:$0xff]
  %v165 = vld [vmem:[#allocation2 + $0x48] sm:$0xff]
  %v166 = vld [vmem:[#allocation2 + $0x50] sm:$0xff]
  %v167 = vld [vmem:[#allocation2 + $0x58] sm:$0xff]
  %v168 = vld [vmem:[#allocation2 + $0x60] sm:$0xff]
  %v169 = vld [vmem:[#allocation2 + $0x68] sm:$0xff]
  %v170 = vld [vmem:[#allocation2 + $0x70] sm:$0xff]
  %v171 = vld [vmem:[#allocation2 + $0x78] sm:$0xff]
  %v172 = vld [vmem:[#allocation2 + $0x80] sm:$0xff]
  %v173 = vld [vmem:[#allocation2 + $0x88] sm:$0xff]
  %vm174 = vcmask 588800
  %v176 = vsel %vm174, %v154, 0
  %v179 = vsel %vm174, %v155, 0
  %181 = vmatpush.msra.mxu0 0.0
  %182 = vmatpush.msra.mxu0 0.0
  %183 = vmatpush.msra.mxu0 0.0
  %184 = vmatpush.msra.mxu0 0.0
  %185 = vmatpush.msra.mxu0 0.0
  %186 = vmatpush.msra.mxu0 0.0
  %187 = vmatpush.msra.mxu0 0.0
  %188 = vmatpush.msra.mxu0 %v172
  %189 = vmatpush.msra.mxu0 %v170
  %190 = vmatpush.msra.mxu0 %v168
  %191 = vmatpush.msra.mxu0 %v166
  %192 = vmatpush.msra.mxu0 %v164
  %193 = vmatpush.msra.mxu0 %v162
  %194 = vmatpush.msra.mxu0 %v160
  %195 = vmatpush.msra.mxu0 %v158
  %196 = vmatpush.msra.mxu0 %v156
  %197 = vmatmul.f32.gmra.mxu0 %v176
  %v198 = vpop.f32.mrf.mxu0
  %v199 = vadd.f32 0.0, %v198
  %200 = vmatmul.f32.gmra.mxu0 %v179
  %v201 = vpop.f32.mrf.mxu0
  %v202 = vadd.f32 0.0, %v201
  %203 = vdwg.mxu0
  %204 = vmatpush.msra.mxu0 0.0
  %205 = vmatpush.msra.mxu0 0.0
  %206 = vmatpush.msra.mxu0 0.0
  %207 = vmatpush.msra.mxu0 0.0
  %208 = vmatpush.msra.mxu0 0.0
  %209 = vmatpush.msra.mxu0 0.0
  %210 = vmatpush.msra.mxu0 0.0
  %211 = vmatpush.msra.mxu0 %v173
  %212 = vmatpush.msra.mxu0 %v171
  %213 = vmatpush.msra.mxu0 %v169
  %214 = vmatpush.msra.mxu0 %v167
  %215 = vmatpush.msra.mxu0 %v165
  %216 = vmatpush.msra.mxu0 %v163
  %217 = vmatpush.msra.mxu0 %v161
  %218 = vmatpush.msra.mxu0 %v159
  %219 = vmatpush.msra.mxu0 %v157
  %220 = vmatmul.f32.gmra.mxu0 %v176
  %v221 = vpop.f32.mrf.mxu0
  %v222 = vadd.f32 0.0, %v221
  %223 = vmatmul.f32.gmra.mxu0 %v179
  %v224 = vpop.f32.mrf.mxu0
  %v225 = vadd.f32 0.0, %v224
  %226 = vdwg.mxu0
  %v228 = vperm.slane %v44, 0
  %v229 = vperm.slane %v44, 1
  %v232 = vmul.f32 %v199, %v228
  %v233 = vmul.f32 %v222, %v229
  %v234 = vadd.f32 %v232, %v233
  %235 = vadd.xlane.f32.xlu0 %v234
  %v236 = vpop.xlane.xlu0 %235
  %v237 = vmul.f32 %v232, %v232
  %v238 = vmul.f32 %v233, %v233
  %v239 = vadd.f32 %v237, %v238
  %240 = vadd.xlane.f32.xlu0 %v239
  %v241 = vpop.xlane.xlu0 %240
  %v242 = vmul.f32 %v236, 0.0078125
  %v243 = vmul.f32 %v241, 0.0078125
  %v244 = vmul.f32 %v242, %v242
  %v245 = vsub.f32 %v243, %v244
  %v246 = vld [vmem:[%s5] sm:$0xff]
  %v247 = vadd.f32 %v245, 1e-05
  %v248 = vrsqrt.pop %v247
  %v249 = vmul.f32 %v248, %v247
  %v250 = vmul.f32 %v249, %v248
  %v251 = vmul.f32 0.5, %v250
  %v252 = vsub.f32 1.5, %v251
  %v253 = vmul.f32 %v248, %v252
  %vm254 = vweird.f32 %v247
  %vm255 = vweird.f32 %v248
  %vm256 = vmor %vm254, %vm255
  %v257 = vsel %vm256, %v248, %v253
  %v258 = vmul.f32 %v246, %v257
  %v259 = vld [vmem:[%s6] sm:$0xff]
  %v260 = vmul.f32 %v242, %v258
  %v261 = vsub.f32 %v259, %v260
  %263 = vset.pattern.permute.xlu0 0
  %264 = vperm.xlu0 %263, %v258
  %v265 = vpop.permute.xlu0 %264
  %v267 = vmul.f32 %v199, %v265
  %v268 = vmul.f32 %v222, %v265
  %270 = vset.pattern.permute.xlu0 0
  %271 = vperm.xlu0 %270, %v261
  %v272 = vpop.permute.xlu0 %271
  %v274 = vadd.f32 %v267, %v272
  %v275 = vadd.f32 %v268, %v272
  %v276 = vmax.f32 %v274, 0.0
  %v277 = vmax.f32 %v275, 0.0
  %v278 = vmul.f32 %v276, %v228
  %v279 = vmul.f32 %v277, %v229
  %280 = vst [vmem:[#allocation3] sm:$0xff] 0.0
  %281 = vst [vmem:[#allocation3 + $0x18] sm:$0xff] 0.0
  %282 = vst [vmem:[#allocation3 + $0x8] sm:$0xff] %v278
  %283 = vst [vmem:[#allocation3 + $0x10] sm:$0xff] %v279
  %v284 = vld [vmem:[#allocation3] sm:$0xff]
  %v285 = vld [vmem:[#allocation3 + $0x8] sm:$0xff]
  %v286 = vld [vmem:[#allocation3 + $0x10] sm:$0xff]
  %290 = vrot.lane.b32.xlu0 %v284, 10
  %v291 = vpop.permute.xlu0 %290
  %292 = vrot.lane.b32.xlu0 %v285, 10
  %v293 = vpop.permute.xlu0 %292
  %294 = vrot.lane.b32.xlu0 %v286, 10
  %v295 = vpop.permute.xlu0 %294
  %vm296 = vcmask 80896
  %v297 = vsel %vm296, %v291, %v293
  %v298 = vsel %vm296, %v293, %v295
  %301 = vst [vmem:[#allocation2] sm:$0xff] %v297
  %302 = vst [vmem:[#allocation2 + $0x8] sm:$0xff] %v298
  %v303 = vld [vmem:[#allocation3] sm:$0xff]
  %v304 = vld [vmem:[#allocation3 + $0x8] sm:$0xff]
  %v305 = vld [vmem:[#allocation3 + $0x10] sm:$0xff]
  %309 = vrot.lane.b32.xlu0 %v303, 9
  %v310 = vpop.permute.xlu0 %309
  %311 = vrot.lane.b32.xlu0 %v304, 9
  %v312 = vpop.permute.xlu0 %311
  %313 = vrot.lane.b32.xlu0 %v305, 9
  %v314 = vpop.permute.xlu0 %313
  %vm315 = vcmask 72704
  %v316 = vsel %vm315, %v310, %v312
  %v317 = vsel %vm315, %v312, %v314
  %320 = vst [vmem:[#allocation2 + $0x10] sm:$0xff] %v316
  %321 = vst [vmem:[#allocation2 + $0x18] sm:$0xff] %v317
  %v322 = vld [vmem:[#allocation3] sm:$0xff]
  %v323 = vld [vmem:[#allocation3 + $0x8] sm:$0xff]
  %v324 = vld [vmem:[#allocation3 + $0x10] sm:$0xff]
  %328 = vrot.lane.b32.xlu0 %v322, 8
  %v329 = vpop.permute.xlu0 %328
  %330 = vrot.lane.b32.xlu0 %v323, 8
  %v331 = vpop.permute.xlu0 %330
  %332 = vrot.lane.b32.xlu0 %v324, 8
  %v333 = vpop.permute.xlu0 %332
  %vm334 = vcmask 64512
  %v335 = vsel %vm334, %v329, %v331
  %v336 = vsel %vm334, %v331, %v333
  %339 = vst [vmem:[#allocation2 + $0x20] sm:$0xff] %v335
  %340 = vst [vmem:[#allocation2 + $0x28] sm:$0xff] %v336
  %v341 = vld [vmem:[#allocation3] sm:$0xff]
  %v342 = vld [vmem:[#allocation3 + $0x8] sm:$0xff]
  %v343 = vld [vmem:[#allocation3 + $0x10] sm:$0xff]
  %347 = vrot.lane.b32.xlu0 %v341, 1
  %v348 = vpop.permute.xlu0 %347
  %349 = vrot.lane.b32.xlu0 %v342, 1
  %v350 = vpop.permute.xlu0 %349
  %351 = vrot.lane.b32.xlu0 %v343, 1
  %v352 = vpop.permute.xlu0 %351
  %vm353 = vcmask 7168
  %v354 = vsel %vm353, %v348, %v350
  %v355 = vsel %vm353, %v350, %v352
  %358 = vst [vmem:[#allocation2 + $0x30] sm:$0xff] %v354
  %359 = vst [vmem:[#allocation2 + $0x38] sm:$0xff] %v355
  %v360 = vld [vmem:[#allocation3 + $0x8] sm:$0xff]
  %v361 = vld [vmem:[#allocation3 + $0x10] sm:$0xff]
  %362 = vst [vmem:[#allocation2 + $0x40] sm:$0xff] %v360
  %363 = vst [vmem:[#allocation2 + $0x48] sm:$0xff] %v361
  %v364 = vld [vmem:[#allocation3 + $0x8] sm:$0xff]
  %v365 = vld [vmem:[#allocation3 + $0x10] sm:$0xff]
  %v366 = vld [vmem:[#allocation3 + $0x18] sm:$0xff]
  %370 = vrot.lane.b32.xlu0 %v364, 127
  %v371 = vpop.permute.xlu0 %370
  %372 = vrot.lane.b32.xlu0 %v365, 127
  %v373 = vpop.permute.xlu0 %372
  %374 = vrot.lane.b32.xlu0 %v366, 127
  %v375 = vpop.permute.xlu0 %374
  %v376 = vsel %vm65, %v371, %v373
  %v377 = vsel %vm65, %v373, %v375
  %380 = vst [vmem:[#allocation2 + $0x50] sm:$0xff] %v376
  %381 = vst [vmem:[#allocation2 + $0x58] sm:$0xff] %v377
  %v382 = vld [vmem:[#allocation3 + $0x8] sm:$0xff]
  %v383 = vld [vmem:[#allocation3 + $0x10] sm:$0xff]
  %v384 = vld [vmem:[#allocation3 + $0x18] sm:$0xff]
  %388 = vrot.lane.b32.xlu0 %v382, 120
  %v389 = vpop.permute.xlu0 %388
  %390 = vrot.lane.b32.xlu0 %v383, 120
  %v391 = vpop.permute.xlu0 %390
  %392 = vrot.lane.b32.xlu0 %v384, 120
  %v393 = vpop.permute.xlu0 %392
  %vm394 = vcmask 982016
  %v395 = vsel %vm394, %v389, %v391
  %v396 = vsel %vm394, %v391, %v393
  %399 = vst [vmem:[#allocation2 + $0x60] sm:$0xff] %v395
  %400 = vst [vmem:[#allocation2 + $0x68] sm:$0xff] %v396
  %v401 = vld [vmem:[#allocation3 + $0x8] sm:$0xff]
  %v402 = vld [vmem:[#allocation3 + $0x10] sm:$0xff]
  %v403 = vld [vmem:[#allocation3 + $0x18] sm:$0xff]
  %407 = vrot.lane.b32.xlu0 %v401, 119
  %v408 = vpop.permute.xlu0 %407
  %409 = vrot.lane.b32.xlu0 %v402, 119
  %v410 = vpop.permute.xlu0 %409
  %411 = vrot.lane.b32.xlu0 %v403, 119
  %v412 = vpop.permute.xlu0 %411
  %v413 = vsel %vm110, %v408, %v410
  %v414 = vsel %vm110, %v410, %v412
  %417 = vst [vmem:[#allocation2 + $0x70] sm:$0xff] %v413
  %418 = vst [vmem:[#allocation2 + $0x78] sm:$0xff] %v414
  %v419 = vld [vmem:[#allocation3 + $0x8] sm:$0xff]
  %v420 = vld [vmem:[#allocation3 + $0x10] sm:$0xff]
  %v421 = vld [vmem:[#allocation3 + $0x18] sm:$0xff]
  %425 = vrot.lane.b32.xlu0 %v419, 118
  %v426 = vpop.permute.xlu0 %425
  %427 = vrot.lane.b32.xlu0 %v420, 118
  %v428 = vpop.permute.xlu0 %427
  %429 = vrot.lane.b32.xlu0 %v421, 118
  %v430 = vpop.permute.xlu0 %429
  %v431 = vsel %vm147, %v426, %v428
  %v432 = vsel %vm147, %v428, %v430
  %435 = vst [vmem:[#allocation2 + $0x80] sm:$0xff] %v431
  %436 = vst [vmem:[#allocation2 + $0x88] sm:$0xff] %v432
  %v437 = vld [vmem:[%s7] sm:$0xff]
  %v438 = vld [vmem:[#allocation2] sm:$0xff]
  %v439 = vld [vmem:[#allocation2 + $0x8] sm:$0xff]
  %v440 = vld [vmem:[#allocation2 + $0x10] sm:$0xff]
  %v441 = vld [vmem:[#allocation2 + $0x18] sm:$0xff]
  %v442 = vld [vmem:[#allocation2 + $0x20] sm:$0xff]
  %v443 = vld [vmem:[#allocation2 + $0x28] sm:$0xff]
  %v444 = vld [vmem:[#allocation2 + $0x30] sm:$0xff]
  %v445 = vld [vmem:[#allocation2 + $0x38] sm:$0xff]
  %v446 = vld [vmem:[#allocation2 + $0x40] sm:$0xff]
  %v447 = vld [vmem:[#allocation2 + $0x48] sm:$0xff]
  %v448 = vld [vmem:[#allocation2 + $0x50] sm:$0xff]
  %v449 = vld [vmem:[#allocation2 + $0x58] sm:$0xff]
  %v450 = vld [vmem:[#allocation2 + $0x60] sm:$0xff]
  %v451 = vld [vmem:[#allocation2 + $0x68] sm:$0xff]
  %v452 = vld [vmem:[#allocation2 + $0x70] sm:$0xff]
  %v453 = vld [vmem:[#allocation2 + $0x78] sm:$0xff]
  %v454 = vld [vmem:[#allocation2 + $0x80] sm:$0xff]
  %v455 = vld [vmem:[#allocation2 + $0x88] sm:$0xff]
  %v457 = vsel %vm174, %v437, 0
  %459 = vmatpush.msra.mxu0 0.0
  %460 = vmatpush.msra.mxu0 0.0
  %461 = vmatpush.msra.mxu0 0.0
  %462 = vmatpush.msra.mxu0 0.0
  %463 = vmatpush.msra.mxu0 0.0
  %464 = vmatpush.msra.mxu0 0.0
  %465 = vmatpush.msra.mxu0 0.0
  %466 = vmatpush.msra.mxu0 %v454
  %467 = vmatpush.msra.mxu0 %v452
  %468 = vmatpush.msra.mxu0 %v450
  %469 = vmatpush.msra.mxu0 %v448
  %470 = vmatpush.msra.mxu0 %v446
  %471 = vmatpush.msra.mxu0 %v444
  %472 = vmatpush.msra.mxu0 %v442
  %473 = vmatpush.msra.mxu0 %v440
  %474 = vmatpush.msra.mxu0 %v438
  %475 = vmatmul.f32.gmra.mxu0 %v457
  %v476 = vpop.f32.mrf.mxu0
  %v477 = vadd.f32 0.0, %v476
  %478 = vdwg.mxu0
  %479 = vmatpush.msra.mxu0 0.0
  %480 = vmatpush.msra.mxu0 0.0
  %481 = vmatpush.msra.mxu0 0.0
  %482 = vmatpush.msra.mxu0 0.0
  %483 = vmatpush.msra.mxu0 0.0
  %484 = vmatpush.msra.mxu0 0.0
  %485 = vmatpush.msra.mxu0 0.0
  %486 = vmatpush.msra.mxu0 %v455
  %487 = vmatpush.msra.mxu0 %v453
  %488 = vmatpush.msra.mxu0 %v451
  %489 = vmatpush.msra.mxu0 %v449
  %490 = vmatpush.msra.mxu0 %v447
  %491 = vmatpush.msra.mxu0 %v445
  %492 = vmatpush.msra.mxu0 %v443
  %493 = vmatpush.msra.mxu0 %v441
  %494 = vmatpush.msra.mxu0 %v439
  %495 = vmatmul.f32.gmra.mxu0 %v457
  %v496 = vpop.f32.mrf.mxu0
  %v497 = vadd.f32 0.0, %v496
  %498 = vdwg.mxu0
  %v499 = vmul.f32 %v477, %v228
  %v500 = vmul.f32 %v497, %v229
  %v501 = vadd.f32 %v499, %v500
  %502 = vadd.xlane.f32.xlu0 %v501
  %v503 = vpop.xlane.xlu0 %502
  %v504 = vmul.f32 %v499, %v499
  %v505 = vmul.f32 %v500, %v500
  %v506 = vadd.f32 %v504, %v505
  %507 = vadd.xlane.f32.xlu0 %v506
  %v508 = vpop.xlane.xlu0 %507
  %v509 = vmul.f32 %v503, 0.0078125
  %v510 = vmul.f32 %v508, 0.0078125
  %v511 = vmul.f32 %v509, %v509
  %v512 = vsub.f32 %v510, %v511
  %v513 = vld [vmem:[%s8] sm:$0xff]
  %v514 = vadd.f32 %v512, 1e-05
  %v515 = vrsqrt.pop %v514
  %v516 = vmul.f32 %v515, %v514
  %v517 = vmul.f32 %v516, %v515
  %v518 = vmul.f32 0.5, %v517
  %v519 = vsub.f32 1.5, %v518
  %v520 = vmul.f32 %v515, %v519
  %vm521 = vweird.f32 %v514
  %vm522 = vweird.f32 %v515
  %vm523 = vmor %vm521, %vm522
  %v524 = vsel %vm523, %v515, %v520
  %v525 = vmul.f32 %v513, %v524
  %v526 = vld [vmem:[%s9] sm:$0xff]
  %v527 = vmul.f32 %v509, %v525
  %v528 = vsub.f32 %v526, %v527
  %530 = vset.pattern.permute.xlu0 0
  %531 = vperm.xlu0 %530, %v525
  %v532 = vpop.permute.xlu0 %531
  %v534 = vmul.f32 %v477, %v532
  %v535 = vmul.f32 %v497, %v532
  %537 = vset.pattern.permute.xlu0 0
  %538 = vperm.xlu0 %537, %v528
  %v539 = vpop.permute.xlu0 %538
  %v541 = vadd.f32 %v534, %v539
  %v542 = vadd.f32 %v535, %v539
  %v543 = vmul.f32 %v202, %v228
  %v544 = vmul.f32 %v225, %v229
  %v545 = vadd.f32 %v543, %v544
  %546 = vadd.xlane.f32.xlu0 %v545
  %v547 = vpop.xlane.xlu0 %546
  %v548 = vmul.f32 %v543, %v543
  %v549 = vmul.f32 %v544, %v544
  %v550 = vadd.f32 %v548, %v549
  %551 = vadd.xlane.f32.xlu0 %v550
  %v552 = vpop.xlane.xlu0 %551
  %v553 = vmul.f32 %v547, 0.0078125
  %v554 = vmul.f32 %v552, 0.0078125
  %v555 = vmul.f32 %v553, %v553
  %v556 = vsub.f32 %v554, %v555
  %v557 = vld [vmem:[%s10] sm:$0xff]
  %v558 = vadd.f32 %v556, 1e-05
  %v559 = vrsqrt.pop %v558
  %v560 = vmul.f32 %v559, %v558
  %v561 = vmul.f32 %v560, %v559
  %v562 = vmul.f32 0.5, %v561
  %v563 = vsub.f32 1.5, %v562
  %v564 = vmul.f32 %v559, %v563
  %vm565 = vweird.f32 %v558
  %vm566 = vweird.f32 %v559
  %vm567 = vmor %vm565, %vm566
  %v568 = vsel %vm567, %v559, %v564
  %v569 = vmul.f32 %v557, %v568
  %v570 = vld [vmem:[%s11] sm:$0xff]
  %v571 = vmul.f32 %v553, %v569
  %v572 = vsub.f32 %v570, %v571
  %574 = vset.pattern.permute.xlu0 0
  %575 = vperm.xlu0 %574, %v569
  %v576 = vpop.permute.xlu0 %575
  %v578 = vmul.f32 %v202, %v576
  %v579 = vmul.f32 %v225, %v576
  %581 = vset.pattern.permute.xlu0 0
  %582 = vperm.xlu0 %581, %v572
  %v583 = vpop.permute.xlu0 %582
  %v585 = vadd.f32 %v578, %v583
  %v586 = vadd.f32 %v579, %v583
  %v587 = vadd.f32 %v541, %v585
  %v588 = vadd.f32 %v542, %v586
  %v589 = vmax.f32 %v587, 0.0
  %v590 = vmax.f32 %v588, 0.0
  %591 = vst [vmem:[%s13] sm:$0xff] %v589
  %592 = vst [vmem:[%s13 + $0x8] sm:$0xff] %v590
  // Predicated region
  $region54: #{_residual_forward.1} parent=0 // pred_check
    _
  $region55: #{_residual_forward.1} parent=0 // pred_check_branch
    %594 = sbr.rel (0) target = $region57
  $region56: #{_residual_forward.1} parent=0 // pred_region
    _
  $region57: #{_residual_forward.1} parent=0 // pred_fallthru
    _
  // Predicated region
  $region58: #{_residual_forward.1} parent=0 // pred_check
    _
  $region59: #{_residual_forward.1} parent=0 // pred_check_branch
    %596 = sbr.rel (0) target = $region61
  $region60: #{_residual_forward.1} parent=0 // pred_region
    _
  $region61: #{_residual_forward.1} parent=0 // pred_fallthru
    _

</llo_original>
